<compile_context>
chip_gen: v7x
topology: tpu7x:2x2x1
jax: 0.10.0
libtpu: 0.0.40
codegen_flags: <defaults>
</compile_context>

<pallas_src>
import jax
import jax.numpy as jnp
from jax.experimental import pallas as pl
from jax.experimental.pallas import tpu as pltpu


def mlp_kernel(x_ref, w1_ref, b1_ref, w2t_ref, b2_ref, out_ref):
    x = x_ref[...]                                            # (TB, D) f32

    # fc1 -> ReLU  (MXU matmul, VPU add/max)
    h = jnp.dot(x, w1_ref[...], preferred_element_type=jnp.float32)
    h = h + b1_ref[...]                                       # (TB, 8) + (1, 8) bcast
    h = jnp.maximum(h, 0.0)

    # fc2 on VPU/XLU: (TB,8) * (1,8) -> lane-reduce -> (TB,1), + scalar bias
    y = jnp.sum(h * w2t_ref[...], axis=1, keepdims=True) + b2_ref[0, 0]

    out_ref[...] = y                                          # (TB, 1)


def model1_forward(x, w1, b1, w2t, b2, *, tb=128):
    """x: (B, D); w1: (D, H); b1: (1, H); w2t: (1, H); b2: (1, 1) -> (B, 1)."""
    B, D = x.shape
    H = w1.shape[1]
    tb = min(tb, B)
    grid = (pl.cdiv(B, tb),)

    return pl.pallas_call(
        mlp_kernel,
        out_shape=jax.ShapeDtypeStruct((B, 1), jnp.float32),
        grid=grid,
        in_specs=[
            pl.BlockSpec((tb, D), lambda i: (i, 0)),                  # x tile (pipelined)
            pl.BlockSpec((D, H), lambda i: (0, 0)),                   # w1 (grid-invariant)
            pl.BlockSpec((1, H), lambda i: (0, 0)),                   # b1 (grid-invariant)
            pl.BlockSpec((1, H), lambda i: (0, 0)),                   # w2^T (grid-invariant)
            pl.BlockSpec(memory_space=pltpu.MemorySpace.SMEM),        # b2 scalar
        ],
        out_specs=pl.BlockSpec((tb, 1), lambda i: (i, 0)),
        compiler_params=pltpu.CompilerParams(
            dimension_semantics=("parallel",),
        ),
    )(x, w1, b1, w2t, b2)


def reference_forward(x, w1, b1, w2t, b2):
    """Pure-JAX transcription of Model1.forward for verification."""
    h = jnp.maximum(x @ w1 + b1, 0.0)
    return h @ w2t.T + b2                                     # (B, 1)


if __name__ == "__main__":
    B, D, H = 128, 16, 8                # batch rows, input_dim, hidden
    TB = 64                             # batch tile (rows per grid step) -> grid of 2

    key = jax.random.PRNGKey(0)
    kx, k1, k2, k3, k4 = jax.random.split(key, 5)

    x = jax.random.normal(kx, (B, D), dtype=jnp.float32)
    # Parameters in kernel-friendly layout (torch fc1.weight (H, D) -> w1 (D, H);
    # torch fc2.weight (1, H) is already the broadcast row w2t).
    w1 = 0.1 * jax.random.normal(k1, (D, H), dtype=jnp.float32)
    b1 = 0.1 * jax.random.normal(k2, (1, H), dtype=jnp.float32)
    w2t = 0.1 * jax.random.normal(k3, (1, H), dtype=jnp.float32)
    b2 = 0.1 * jax.random.normal(k4, (1, 1), dtype=jnp.float32)

    out = model1_forward(x, w1, b1, w2t, b2, tb=TB)
    out = jax.block_until_ready(out)

    ref = reference_forward(x, w1, b1, w2t, b2)
    assert out.shape == (B, 1), out.shape
    assert jnp.allclose(out, ref, atol=1e-5, rtol=1e-5), (
        float(jnp.max(jnp.abs(out - ref))))

    print("KERNEL_OK")
</pallas_src>

<mosaic_0001>
module attributes {stable_mosaic.version = 11 : i64} {
  func.func @mlp_kernel(%arg0: i32, %arg1: memref<64x16xf32, #tpu.memory_space<vmem>>, %arg2: memref<16x8xf32, #tpu.memory_space<vmem>>, %arg3: memref<1x8xf32, #tpu.memory_space<vmem>>, %arg4: memref<1x8xf32, #tpu.memory_space<vmem>>, %arg5: memref<1x1xf32, #tpu.memory_space<smem>>, %arg6: memref<64x1xf32, #tpu.memory_space<vmem>>) attributes {dimension_semantics = [#tpu.dimension_semantics<parallel>], iteration_bounds = array<i64: 2>, scalar_prefetch = 0 : i64, scratch_operands = 0 : i64, tpu.core_type = #tpu.core_type<tc>, window_params = [{transform_indices = @transform_0, window_bounds = array<i64: 64, 16>}, {pipeline_mode = #tpu.pipeline_mode<synchronous>, transform_indices = @transform_1, window_bounds = array<i64: 16, 8>}, {pipeline_mode = #tpu.pipeline_mode<synchronous>, transform_indices = @transform_2, window_bounds = array<i64: 1, 8>}, {pipeline_mode = #tpu.pipeline_mode<synchronous>, transform_indices = @transform_3, window_bounds = array<i64: 1, 8>}, {transform_indices = @transform_4, window_bounds = array<i64: 1, 1>}, {transform_indices = @transform_5, window_bounds = array<i64: 64, 1>}]} {
    %c0 = arith.constant 0 : index
    %c0_0 = arith.constant 0 : index
    %0 = vector.load %arg1[%c0, %c0_0] : memref<64x16xf32, #tpu.memory_space<vmem>>, vector<64x16xf32>
    %c0_1 = arith.constant 0 : index
    %c0_2 = arith.constant 0 : index
    %1 = vector.load %arg2[%c0_1, %c0_2] : memref<16x8xf32, #tpu.memory_space<vmem>>, vector<16x8xf32>
    %cst = arith.constant dense<0.000000e+00> : vector<64x8xf32>
    %2 = tpu.matmul %0, %1, %cst {dimension_numbers = #tpu.dot_dimension_numbers<[1], [0], [0], [1], [0, 0, 1, 1], [], []>} : vector<64x16xf32>, vector<16x8xf32>, vector<64x8xf32> -> vector<64x8xf32>
    %c0_3 = arith.constant 0 : index
    %c0_4 = arith.constant 0 : index
    %3 = vector.load %arg3[%c0_3, %c0_4] : memref<1x8xf32, #tpu.memory_space<vmem>>, vector<1x8xf32>
    %4 = vector.broadcast %3 : vector<1x8xf32> to vector<64x8xf32>
    %5 = arith.addf %2, %4 : vector<64x8xf32>
    %cst_5 = arith.constant 0.000000e+00 : f32
    %6 = vector.broadcast %cst_5 : f32 to vector<64x8xf32>
    %7 = arith.maximumf %5, %6 : vector<64x8xf32>
    %c0_6 = arith.constant 0 : index
    %c0_7 = arith.constant 0 : index
    %8 = vector.load %arg4[%c0_6, %c0_7] : memref<1x8xf32, #tpu.memory_space<vmem>>, vector<1x8xf32>
    %9 = vector.broadcast %8 : vector<1x8xf32> to vector<64x8xf32>
    %10 = arith.mulf %7, %9 : vector<64x8xf32>
    %cst_8 = arith.constant dense<0.000000e+00> : vector<64xf32>
    %11 = vector.multi_reduction <add>, %10, %cst_8 [1] : vector<64x8xf32> to vector<64xf32>
    %12 = vector.shape_cast %11 : vector<64xf32> to vector<64x1xf32>
    %c0_9 = arith.constant 0 : index
    %c0_10 = arith.constant 0 : index
    %13 = memref.load %arg5[%c0_9, %c0_10] : memref<1x1xf32, #tpu.memory_space<smem>>
    %14 = vector.broadcast %13 : f32 to vector<64x1xf32>
    %15 = arith.addf %12, %14 : vector<64x1xf32>
    %c0_11 = arith.constant 0 : index
    %c0_12 = arith.constant 0 : index
    %16 = vector.load %arg6[%c0_11, %c0_12] : memref<64x1xf32, #tpu.memory_space<vmem>>, vector<64x1xf32>
    tpu.vector_store %arg6[%c0_11, %c0_12], %15 {strides = array<i32>} : memref<64x1xf32, #tpu.memory_space<vmem>>, vector<64x1xf32>,
    return
  }
  func.func @transform_0(%arg0: i32) -> (i32, i32) {
    %c0_i32 = arith.constant 0 : i32
    %c0_i32_0 = arith.constant 0 : i32
    return %arg0, %c0_i32 : i32, i32
  }
  func.func @transform_1(%arg0: i32) -> (i32, i32) {
    %c0_i32 = arith.constant 0 : i32
    %c0_i32_0 = arith.constant 0 : i32
    %c0_i32_1 = arith.constant 0 : i32
    return %c0_i32, %c0_i32_0 : i32, i32
  }
  func.func @transform_2(%arg0: i32) -> (i32, i32) {
    %c0_i32 = arith.constant 0 : i32
    %c0_i32_0 = arith.constant 0 : i32
    %c0_i32_1 = arith.constant 0 : i32
    return %c0_i32, %c0_i32_0 : i32, i32
  }
  func.func @transform_3(%arg0: i32) -> (i32, i32) {
    %c0_i32 = arith.constant 0 : i32
    %c0_i32_0 = arith.constant 0 : i32
    %c0_i32_1 = arith.constant 0 : i32
    return %c0_i32, %c0_i32_0 : i32, i32
  }
  func.func @transform_4(%arg0: i32) -> (i32, i32) {
    %c0_i32 = arith.constant 0 : i32
    %c0_i32_0 = arith.constant 0 : i32
    %c0_i32_1 = arith.constant 0 : i32
    return %c0_i32, %c0_i32_0 : i32, i32
  }
  func.func @transform_5(%arg0: i32) -> (i32, i32) {
    %c0_i32 = arith.constant 0 : i32
    %c0_i32_0 = arith.constant 0 : i32
    return %arg0, %c0_i32 : i32, i32
  }
}

</mosaic_0001>

<llo_original>
// kernel: tpu_custom_call.1
$region0: #{tpu_custom_call.1}
  #allocation0 [shape = 'u32[]', space=smem, size = 0x4, offset = 0x4, fixed_abs, tag = 'smem constant byte address 0x4 - core index']
  #allocation1 [shape = 'u32[144,128]{1,0:T(1,128)}', space=vmem, size = 0x12000, scoped, tag = 'internal scratch']
  #allocation2 [shape = 'f32[1,1]{1,0:T(1,128)S(6)}', space=smem, size = 0x200, scoped, tag = 'scoped memory for tpu_custom_call.1']
  %s0 = inlined_call_operand.vmem [shape: f32[128,16], index: 0, kind: input, shape index: {}]
  %s1 = inlined_call_operand.vmem [shape: f32[16,8], index: 1, kind: input, shape index: {}]
  %s2 = inlined_call_operand.vmem [shape: f32[1,8], index: 2, kind: input, shape index: {}]
  %s3 = inlined_call_operand.vmem [shape: f32[1,8], index: 3, kind: input, shape index: {}]
  %s4 = inlined_call_operand.<no memory space> [shape: f32[1,1], index: 4, kind: input, shape index: {}]
  %s5 = inlined_call_operand.vmem [shape: f32[128,1], index: 5, kind: output, shape index: {}]
  %s6 = sld [smem:[#allocation0]]
  $region53: #{tpu_custom_call.1} parent=0
    _
  %s8 = ssub.s32 1, %s6
  %s9 = scalar_select 0, %s8, %s6
  %10 = sst [smem:[#allocation2]] %s4
  loop: start=0, step=1, limit=4
  $region2: #{tpu_custom_call.1} parent=0 // loop_pre_header
    _
  $region3: #{tpu_custom_call.1} parent=0 // loop_header
    %s12 = sphi 0, %s16
    %p13 = scmp.ge.s32.totalorder %s12, 4
    %s22 = sphi 0, %s24
    %s25 = sphi 0, %s22
    %s26 = sphi 0, %s25
    %s42 = sphi 0, %s26
    %s46 = sphi 0, %s46
    %s48 = sphi 0, %s46
    %s49 = sphi 0, %s48
    %s63 = sphi 0, %s49
    %s67 = sphi 0, %s67
    %s69 = sphi 0, %s67
    %s70 = sphi 0, %s69
    %s84 = sphi 0, %s70
    %s88 = sphi 0, %s88
    %s90 = sphi 0, %s88
    %s91 = sphi 0, %s90
    %s105 = sphi 0, %s91
    %s109 = sphi 0, %s109
    %s111 = sphi 0, %s109
    %s112 = sphi 0, %s111
    %s126 = sphi 0, %s112
    %s132 = sphi 0, %s134
    %s135 = sphi 0, %s132
    %s136 = sphi 0, %s135
    %s152 = sphi 0, %s136
  $region4: #{tpu_custom_call.1} parent=0 // loop_header_branch
    %15 = sbr.rel (%p13) target = $region8
  $region5: #{tpu_custom_call.1} parent=0 // loop_body
    %s17 = ssub.s32 %s12, 1
    %s18 = ssub.s32 %s12, 2
    %s19 = sadd.s32 %s12, 1
    %s20 = ssub.s32 %s12, %s19
    %p21 = scmp.eq.s32.totalorder %s20, 0
    %s23 = sadd.s32 %s22, 1
    %s24 = scalar_select %p21, %s22, %s23
    %p27 = pneg %p21
    %p28 = scmp.eq.s32.totalorder %s12, 1
    %p29 = por %p27, %p28
    %p30 = scmp.ne.s32.totalorder %s22, %s25
    %p31 = scmp.eq.s32.totalorder %s12, 0
    %p32 = por %p30, %p31
    %p33 = scmp.ne.s32.totalorder %s22, %s25
    %p34 = scmp.eq.s32.totalorder %s17, 1
    %p35 = por %p33, %p34
    %p36 = scmp.ne.s32.totalorder %s25, %s26
    %p37 = scmp.eq.s32.totalorder %s17, 0
    %p38 = por %p36, %p37
    %p39 = scmp.ne.s32.totalorder %s25, %s26
    %p40 = scmp.eq.s32.totalorder %s18, 1
    %p41 = por %p39, %p40
    %p43 = scmp.ne.s32.totalorder %s26, %s42
    %p44 = scmp.eq.s32.totalorder %s18, 0
    %p45 = por %p43, %p44
    %s47 = sadd.s32 %s46, 1
    %p50 = scmp.eq.s32.totalorder %s12, 1
    %p51 = scmp.ne.s32.totalorder %s46, %s48
    %p52 = scmp.eq.s32.totalorder %s12, 0
    %p53 = por %p51, %p52
    %p54 = scmp.ne.s32.totalorder %s46, %s48
    %p55 = scmp.eq.s32.totalorder %s17, 1
    %p56 = por %p54, %p55
    %p57 = scmp.ne.s32.totalorder %s48, %s49
    %p58 = scmp.eq.s32.totalorder %s17, 0
    %p59 = por %p57, %p58
    %p60 = scmp.ne.s32.totalorder %s48, %s49
    %p61 = scmp.eq.s32.totalorder %s18, 1
    %p62 = por %p60, %p61
    %p64 = scmp.ne.s32.totalorder %s49, %s63
    %p65 = scmp.eq.s32.totalorder %s18, 0
    %p66 = por %p64, %p65
    %s68 = sadd.s32 %s67, 1
    %p71 = scmp.eq.s32.totalorder %s12, 1
    %p72 = scmp.ne.s32.totalorder %s67, %s69
    %p73 = scmp.eq.s32.totalorder %s12, 0
    %p74 = por %p72, %p73
    %p75 = scmp.ne.s32.totalorder %s67, %s69
    %p76 = scmp.eq.s32.totalorder %s17, 1
    %p77 = por %p75, %p76
    %p78 = scmp.ne.s32.totalorder %s69, %s70
    %p79 = scmp.eq.s32.totalorder %s17, 0
    %p80 = por %p78, %p79
    %p81 = scmp.ne.s32.totalorder %s69, %s70
    %p82 = scmp.eq.s32.totalorder %s18, 1
    %p83 = por %p81, %p82
    %p85 = scmp.ne.s32.totalorder %s70, %s84
    %p86 = scmp.eq.s32.totalorder %s18, 0
    %p87 = por %p85, %p86
    %s89 = sadd.s32 %s88, 1
    %p92 = scmp.eq.s32.totalorder %s12, 1
    %p93 = scmp.ne.s32.totalorder %s88, %s90
    %p94 = scmp.eq.s32.totalorder %s12, 0
    %p95 = por %p93, %p94
    %p96 = scmp.ne.s32.totalorder %s88, %s90
    %p97 = scmp.eq.s32.totalorder %s17, 1
    %p98 = por %p96, %p97
    %p99 = scmp.ne.s32.totalorder %s90, %s91
    %p100 = scmp.eq.s32.totalorder %s17, 0
    %p101 = por %p99, %p100
    %p102 = scmp.ne.s32.totalorder %s90, %s91
    %p103 = scmp.eq.s32.totalorder %s18, 1
    %p104 = por %p102, %p103
    %p106 = scmp.ne.s32.totalorder %s91, %s105
    %p107 = scmp.eq.s32.totalorder %s18, 0
    %p108 = por %p106, %p107
    %s110 = sadd.s32 %s109, 1
    %p113 = scmp.eq.s32.totalorder %s12, 1
    %p114 = scmp.ne.s32.totalorder %s109, %s111
    %p115 = scmp.eq.s32.totalorder %s12, 0
    %p116 = por %p114, %p115
    %p117 = scmp.ne.s32.totalorder %s109, %s111
    %p118 = scmp.eq.s32.totalorder %s17, 1
    %p119 = por %p117, %p118
    %p120 = scmp.ne.s32.totalorder %s111, %s112
    %p121 = scmp.eq.s32.totalorder %s17, 0
    %p122 = por %p120, %p121
    %p123 = scmp.ne.s32.totalorder %s111, %s112
    %p124 = scmp.eq.s32.totalorder %s18, 1
    %p125 = por %p123, %p124
    %p127 = scmp.ne.s32.totalorder %s112, %s126
    %p128 = scmp.eq.s32.totalorder %s18, 0
    %p129 = por %p127, %p128
    %s130 = ssub.s32 %s12, %s19
    %p131 = scmp.eq.s32.totalorder %s130, 0
    %s133 = sadd.s32 %s132, 1
    %s134 = scalar_select %p131, %s132, %s133
    %p137 = pneg %p131
    %p138 = scmp.eq.s32.totalorder %s12, 1
    %p139 = por %p137, %p138
    %p140 = scmp.ne.s32.totalorder %s132, %s135
    %p141 = scmp.eq.s32.totalorder %s12, 0
    %p142 = por %p140, %p141
    %p143 = scmp.ne.s32.totalorder %s132, %s135
    %p144 = scmp.eq.s32.totalorder %s17, 1
    %p145 = por %p143, %p144
    %p146 = scmp.ne.s32.totalorder %s135, %s136
    %p147 = scmp.eq.s32.totalorder %s17, 0
    %p148 = por %p146, %p147
    %p149 = scmp.ne.s32.totalorder %s135, %s136
    %p150 = scmp.eq.s32.totalorder %s18, 1
    %p151 = por %p149, %p150
    %p153 = scmp.ne.s32.totalorder %s136, %s152
    %p154 = scmp.eq.s32.totalorder %s18, 0
    %p155 = por %p153, %p154
    %p156 = scmp.le.s32.totalorder 1, %s12
    %p157 = scmp.lt.s32.totalorder %s12, 3
    %p158 = pnand %p156, %p157
    %p159 = pneg %p158
    // Predicated region
    $region9: #{tpu_custom_call.1} parent=5 // pred_check
      _
    $region10: #{tpu_custom_call.1} parent=5 // pred_check_branch
      %161 = sbr.rel (%p158) target = $region12
    $region11: #{tpu_custom_call.1} parent=5 // pred_region
      %s162 = ssub.s32 %s12, 1
      // Predicated region
      $region13: #{tpu_custom_call.1} parent=11 // pred_check
        %p163 = pneg %p59
      $region14: #{tpu_custom_call.1} parent=11 // pred_check_branch
        %165 = sbr.rel (%p163) target = $region16
      $region15: #{tpu_custom_call.1} parent=11 // pred_region
        _
      $region16: #{tpu_custom_call.1} parent=11 // pred_fallthru
        _
      // Predicated region
      $region17: #{tpu_custom_call.1} parent=11 // pred_check
        %p166 = pneg %p80
      $region18: #{tpu_custom_call.1} parent=11 // pred_check_branch
        %168 = sbr.rel (%p166) target = $region20
      $region19: #{tpu_custom_call.1} parent=11 // pred_region
        _
      $region20: #{tpu_custom_call.1} parent=11 // pred_fallthru
        _
      // Predicated region
      $region21: #{tpu_custom_call.1} parent=11 // pred_check
        %p169 = pneg %p101
      $region22: #{tpu_custom_call.1} parent=11 // pred_check_branch
        %171 = sbr.rel (%p169) target = $region24
      $region23: #{tpu_custom_call.1} parent=11 // pred_region
        _
      $region24: #{tpu_custom_call.1} parent=11 // pred_fallthru
        _
      // Predicated region
      $region25: #{tpu_custom_call.1} parent=11 // pred_check
        %p172 = pneg %p122
      $region26: #{tpu_custom_call.1} parent=11 // pred_check_branch
        %174 = sbr.rel (%p172) target = $region28
      $region27: #{tpu_custom_call.1} parent=11 // pred_region
        _
      $region28: #{tpu_custom_call.1} parent=11 // pred_fallthru
        _
    $region12: #{tpu_custom_call.1} parent=5 // pred_fallthru
      _
    %p175 = scmp.lt.s32.totalorder %s12, 2
    // Predicated region
    $region29: #{tpu_custom_call.1} parent=5 // pred_check
      %p176 = pneg %p175
    $region30: #{tpu_custom_call.1} parent=5 // pred_check_branch
      %178 = sbr.rel (%p176) target = $region32
    $region31: #{tpu_custom_call.1} parent=5 // pred_region
      // Predicated region
      $region33: #{tpu_custom_call.1} parent=31 // pred_check
        %p179 = pneg %p32
      $region34: #{tpu_custom_call.1} parent=31 // pred_check_branch
        %181 = sbr.rel (%p179) target = $region36
      $region35: #{tpu_custom_call.1} parent=31 // pred_region
        %s182 = smul.u32 8, %s12
        %p183 = scmp.lt.s32.totalorder %s182, 15
        %s184 = scalar_select %p183, %s182, 15
        %s185 = smul.addr %s184, 8
        %s186 = scalar_lea.vmem %s0, %s185
        %s187 = smul.u32 8, %s12
      $region36: #{tpu_custom_call.1} parent=31 // pred_fallthru
        _
    $region32: #{tpu_custom_call.1} parent=5 // pred_fallthru
      _
    %p188 = scmp.le.s32.totalorder 1, %s12
    %p189 = scmp.lt.s32.totalorder %s12, 3
    %p190 = pnand %p188, %p189
    %p191 = pneg %p190
    // Predicated region
    $region37: #{tpu_custom_call.1} parent=5 // pred_check
      _
    $region38: #{tpu_custom_call.1} parent=5 // pred_check_branch
      %193 = sbr.rel (%p190) target = $region40
    $region39: #{tpu_custom_call.1} parent=5 // pred_region
      %s194 = ssub.s32 %s12, 1
      %s195 = smul.u32 8, %s17
      %p196 = scmp.lt.s32.totalorder %s195, 15
      %s197 = scalar_select %p196, %s195, 15
      %s198 = smul.addr %s197, 8
      %s199 = scalar_lea.vmem %s0, %s198
      %p200 = pneg %p38
      %p201 = pneg %p35
      %p202 = pneg %p59
      %p203 = pneg %p56
      %p204 = pneg %p80
      %p205 = pneg %p77
      %p206 = pneg %p101
      %p207 = pneg %p98
      %p208 = pneg %p122
      %p209 = pneg %p119
      %p210 = pneg %p148
      %p211 = pneg %p145
      %s212 = smul.u32 8, %s17
      %p213 = scmp.lt.s32.totalorder %s212, 15
      %s214 = scalar_select %p213, %s212, 15
      %s215 = smul.addr %s214, 8
      %s216 = scalar_lea.vmem %s5, %s215
      %s217 = smul.u32 8, %s17
      %p218 = scmp.lt.s32.totalorder %s217, 15
      %s219 = scalar_select %p218, %s217, 15
      %s220 = smul.addr %s219, 8
      %s221 = scalar_lea.vmem %s0, %s220
      %s222 = smul.u32 8, %s17
      %s223 = smul.u32 8, %s17
      %p224 = scmp.lt.s32.totalorder %s223, 15
      %s225 = scalar_select %p224, %s223, 15
      %s226 = smul.addr %s225, 8
      %s227 = scalar_lea.vmem %s5, %s226
      %s228 = smul.u32 8, %s17
      %v229 = vld [vmem:[%s221] sm:$0xff]
      %v230 = vld [vmem:[%s221 + $0x8] sm:$0xff]
      %v231 = vld [vmem:[%s221 + $0x10] sm:$0xff]
      %v232 = vld [vmem:[%s221 + $0x18] sm:$0xff]
      %v233 = vld [vmem:[%s221 + $0x20] sm:$0xff]
      %v234 = vld [vmem:[%s221 + $0x28] sm:$0xff]
      %v235 = vld [vmem:[%s221 + $0x30] sm:$0xff]
      %v236 = vld [vmem:[%s221 + $0x38] sm:$0xff]
      %v237 = vld [vmem:[%s1] sm:$0xff]
      %v238 = vld [vmem:[%s1 + $0x8] sm:$0xff]
      %v239 = vld [vmem:[%s2] sm:$0x1]
      %v241 = vlaneseq
      %v242 = vshrl.u32 %v241, 7
      %v243 = vsub.s32 0, %v242
      %v244 = vrot.slane %v239, %v243
      %vm246 = vcmask 130048
      %v248 = vsel %vm246, %v229, 0
      %v251 = vsel %vm246, %v230, 0
      %v254 = vsel %vm246, %v231, 0
      %v257 = vsel %vm246, %v232, 0
      %v260 = vsel %vm246, %v233, 0
      %v263 = vsel %vm246, %v234, 0
      %v266 = vsel %vm246, %v235, 0
      %v269 = vsel %vm246, %v236, 0
      %271 = vmatprep.subr.mxu0 0.0
      %272 = vmatpush1.msra.mxu0 %v237
      %273 = vmatprep.subr.mxu0 0.0
      %274 = vmatpush1.msra.mxu0 %v238
      %275 = vmatprep.subr.mxu0 0.0
      %276 = vmatpush1.msra.mxu0 0.0
      %277 = vmatprep.subr.mxu0 0.0
      %278 = vmatpush1.msra.mxu0 0.0
      %279 = vmatprep.subr.mxu0 0.0
      %280 = vmatpush1.msra.mxu0 0.0
      %281 = vmatprep.subr.mxu0 0.0
      %282 = vmatpush1.msra.mxu0 0.0
      %283 = vmatprep.subr.mxu0 0.0
      %284 = vmatpush1.msra.mxu0 0.0
      %285 = vmatprep.subr.mxu0 0.0
      %286 = vmatpush1.msra.mxu0 0.0
      %287 = vmatprep.subr.mxu0 0.0
      %288 = vmatpush1.msra.mxu0 0.0
      %289 = vmatprep.subr.mxu0 0.0
      %290 = vmatpush1.msra.mxu0 0.0
      %291 = vmatprep.subr.mxu0 0.0
      %292 = vmatpush1.msra.mxu0 0.0
      %293 = vmatprep.subr.mxu0 0.0
      %294 = vmatpush1.msra.mxu0 0.0
      %295 = vmatprep.subr.mxu0 0.0
      %296 = vmatpush1.msra.mxu0 0.0
      %297 = vmatprep.subr.mxu0 0.0
      %298 = vmatpush1.msra.mxu0 0.0
      %299 = vmatprep.subr.mxu0 0.0
      %300 = vmatpush1.msra.mxu0 0.0
      %301 = vmatprep.subr.mxu0 0.0
      %302 = vmatpush1.msra.mxu0 0.0
      %303 = vmatprep.subr.mxu0 0.0
      %304 = vmatpush1.msra.mxu0 0.0
      %305 = vmatprep.subr.mxu0 0.0
      %306 = vmatpush1.msra.mxu0 0.0
      %307 = vmatprep.subr.mxu0 0.0
      %308 = vmatpush1.msra.mxu0 0.0
      %309 = vmatprep.subr.mxu0 0.0
      %310 = vmatpush1.msra.mxu0 0.0
      %311 = vmatprep.subr.mxu0 0.0
      %312 = vmatpush1.msra.mxu0 0.0
      %313 = vmatprep.subr.mxu0 0.0
      %314 = vmatpush1.msra.mxu0 0.0
      %315 = vmatprep.subr.mxu0 0.0
      %316 = vmatpush1.msra.mxu0 0.0
      %317 = vmatprep.subr.mxu0 0.0
      %318 = vmatpush1.msra.mxu0 0.0
      %319 = vmatprep.subr.mxu0 0.0
      %320 = vmatpush1.msra.mxu0 0.0
      %321 = vmatprep.subr.mxu0 0.0
      %322 = vmatpush1.msra.mxu0 0.0
      %323 = vmatprep.subr.mxu0 0.0
      %324 = vmatpush1.msra.mxu0 0.0
      %325 = vmatprep.subr.mxu0 0.0
      %326 = vmatpush1.msra.mxu0 0.0
      %327 = vmatprep.subr.mxu0 0.0
      %328 = vmatpush1.msra.mxu0 0.0
      %329 = vmatprep.subr.mxu0 0.0
      %330 = vmatpush1.msra.mxu0 0.0
      %331 = vmatprep.subr.mxu0 0.0
      %332 = vmatpush1.msra.mxu0 0.0
      %333 = vmatprep.subr.mxu0 0.0
      %334 = vmatpush1.msra.mxu0 0.0
      %335 = vmatprep.mubr.f32.mxu0 0.0
      %336 = vmatmul.mubr.f32.gmra.mrb[0].mxu0 %v248
      %v337 = vpop.f32.mrb[0].mxu0
      %v338 = vadd.f32 %v244, %v337
      %v339 = vpop.f32.mrb[0].mxu0
      %340 = vmatprep.mubr.f32.mxu0 0.0
      %341 = vmatmul.mubr.f32.gmra.mrb[0].mxu0 %v251
      %v342 = vpop.f32.mrb[0].mxu0
      %v343 = vadd.f32 %v244, %v342
      %v344 = vpop.f32.mrb[0].mxu0
      %345 = vmatprep.mubr.f32.mxu0 0.0
      %346 = vmatmul.mubr.f32.gmra.mrb[0].mxu0 %v254
      %v347 = vpop.f32.mrb[0].mxu0
      %v348 = vadd.f32 %v244, %v347
      %v349 = vpop.f32.mrb[0].mxu0
      %350 = vmatprep.mubr.f32.mxu0 0.0
      %351 = vmatmul.mubr.f32.gmra.mrb[0].mxu0 %v257
      %v352 = vpop.f32.mrb[0].mxu0
      %v353 = vadd.f32 %v244, %v352
      %v354 = vpop.f32.mrb[0].mxu0
      %355 = vmatprep.mubr.f32.mxu0 0.0
      %356 = vmatmul.mubr.f32.gmra.mrb[0].mxu0 %v260
      %v357 = vpop.f32.mrb[0].mxu0
      %v358 = vadd.f32 %v244, %v357
      %v359 = vpop.f32.mrb[0].mxu0
      %360 = vmatprep.mubr.f32.mxu0 0.0
      %361 = vmatmul.mubr.f32.gmra.mrb[0].mxu0 %v263
      %v362 = vpop.f32.mrb[0].mxu0
      %v363 = vadd.f32 %v244, %v362
      %v364 = vpop.f32.mrb[0].mxu0
      %365 = vmatprep.mubr.f32.mxu0 0.0
      %366 = vmatmul.mubr.f32.gmra.mrb[0].mxu0 %v266
      %v367 = vpop.f32.mrb[0].mxu0
      %v368 = vadd.f32 %v244, %v367
      %v369 = vpop.f32.mrb[0].mxu0
      %370 = vmatprep.mubr.f32.mxu0 0.0
      %371 = vmatmul.mubr.f32.gmra.mrb[0].mxu0 %v269
      %v372 = vpop.f32.mrb[0].mxu0
      %v373 = vadd.f32 %v244, %v372
      %v374 = vpop.f32.mrb[0].mxu0
      %375 = vdwg.mxu0
      %v376 = vmax.f32 %v338, 0.0
      %v377 = vmax.f32 %v343, 0.0
      %v378 = vmax.f32 %v348, 0.0
      %v379 = vmax.f32 %v353, 0.0
      %v380 = vmax.f32 %v358, 0.0
      %v381 = vmax.f32 %v363, 0.0
      %v382 = vmax.f32 %v368, 0.0
      %v383 = vmax.f32 %v373, 0.0
      %v384 = vld [vmem:[%s3] sm:$0x1]
      %v386 = vlaneseq
      %v387 = vshrl.u32 %v386, 7
      %v388 = vsub.s32 0, %v387
      %v389 = vrot.slane %v384, %v388
      %v391 = vmul.f32 %v376, %v389
      %v392 = vmul.f32 %v377, %v389
      %v393 = vmul.f32 %v378, %v389
      %v394 = vmul.f32 %v379, %v389
      %v395 = vmul.f32 %v380, %v389
      %v396 = vmul.f32 %v381, %v389
      %v397 = vmul.f32 %v382, %v389
      %v398 = vmul.f32 %v383, %v389
      %vm399 = vcmask 64512
      %v400 = vsel %vm399, %v391, 0.0
      %401 = vadd.xlane.f32.xlu0 %v400
      %v402 = vpop.xlane.xlu0 %401
      %v403 = vsel %vm399, %v392, 0.0
      %404 = vadd.xlane.f32.xlu0 %v403
      %v405 = vpop.xlane.xlu0 %404
      %v406 = vsel %vm399, %v393, 0.0
      %407 = vadd.xlane.f32.xlu0 %v406
      %v408 = vpop.xlane.xlu0 %407
      %v409 = vsel %vm399, %v394, 0.0
      %410 = vadd.xlane.f32.xlu0 %v409
      %v411 = vpop.xlane.xlu0 %410
      %v412 = vsel %vm399, %v395, 0.0
      %413 = vadd.xlane.f32.xlu0 %v412
      %v414 = vpop.xlane.xlu0 %413
      %v415 = vsel %vm399, %v396, 0.0
      %416 = vadd.xlane.f32.xlu0 %v415
      %v417 = vpop.xlane.xlu0 %416
      %v418 = vsel %vm399, %v397, 0.0
      %419 = vadd.xlane.f32.xlu0 %v418
      %v420 = vpop.xlane.xlu0 %419
      %v421 = vsel %vm399, %v398, 0.0
      %422 = vadd.xlane.f32.xlu0 %v421
      %v423 = vpop.xlane.xlu0 %422
      %s424 = sld [smem:[#allocation2]]
      %v425 = vstv %s424
      %v426 = vadd.f32 %v402, %v425
      %v427 = vadd.f32 %v405, %v425
      %v428 = vadd.f32 %v408, %v425
      %v429 = vadd.f32 %v411, %v425
      %v430 = vadd.f32 %v414, %v425
      %v431 = vadd.f32 %v417, %v425
      %v432 = vadd.f32 %v420, %v425
      %v433 = vadd.f32 %v423, %v425
      %vm434 = vcmask 7168
      %435 = vst.msk [vmem:[%s227] sm:$0xff] %vm434, %v426
      %436 = vst.msk [vmem:[%s227 + $0x8] sm:$0xff] %vm434, %v427
      %437 = vst.msk [vmem:[%s227 + $0x10] sm:$0xff] %vm434, %v428
      %438 = vst.msk [vmem:[%s227 + $0x18] sm:$0xff] %vm434, %v429
      %439 = vst.msk [vmem:[%s227 + $0x20] sm:$0xff] %vm434, %v430
      %440 = vst.msk [vmem:[%s227 + $0x28] sm:$0xff] %vm434, %v431
      %441 = vst.msk [vmem:[%s227 + $0x30] sm:$0xff] %vm434, %v432
      %442 = vst.msk [vmem:[%s227 + $0x38] sm:$0xff] %vm434, %v433
      %s443 = smul.u32 8, %s17
      %p444 = scmp.lt.s32.totalorder %s443, 15
      %s445 = scalar_select %p444, %s443, 15
      %s446 = smul.addr %s445, 8
      %s447 = scalar_lea.vmem %s5, %s446
      // Predicated region
      $region41: #{tpu_custom_call.1} parent=39 // pred_check
        %p448 = pneg %p145
      $region42: #{tpu_custom_call.1} parent=39 // pred_check_branch
        %450 = sbr.rel (%p448) target = $region44
      $region43: #{tpu_custom_call.1} parent=39 // pred_region
        %s451 = smul.u32 8, %s17
      $region44: #{tpu_custom_call.1} parent=39 // pred_fallthru
        _
    $region40: #{tpu_custom_call.1} parent=5 // pred_fallthru
      _
    %p452 = scmp.le.s32.totalorder 2, %s12
    // Predicated region
    $region45: #{tpu_custom_call.1} parent=5 // pred_check
      %p453 = pneg %p452
    $region46: #{tpu_custom_call.1} parent=5 // pred_check_branch
      %455 = sbr.rel (%p453) target = $region48
    $region47: #{tpu_custom_call.1} parent=5 // pred_region
      %s456 = ssub.s32 %s12, 2
      // Predicated region
      $region49: #{tpu_custom_call.1} parent=47 // pred_check
        %p457 = pneg %p151
      $region50: #{tpu_custom_call.1} parent=47 // pred_check_branch
        %459 = sbr.rel (%p457) target = $region52
      $region51: #{tpu_custom_call.1} parent=47 // pred_region
        %s460 = smul.u32 8, %s18
        %p461 = scmp.lt.s32.totalorder %s460, 15
        %s462 = scalar_select %p461, %s460, 15
        %s463 = smul.addr %s462, 8
        %s464 = scalar_lea.vmem %s5, %s463
      $region52: #{tpu_custom_call.1} parent=47 // pred_fallthru
        _
    $region48: #{tpu_custom_call.1} parent=5 // pred_fallthru
      _
  $region6: #{tpu_custom_call.1} parent=0 // loop_footer
    %s16 = sadd.s32 1, %s12
  $region7: #{tpu_custom_call.1} parent=0 // loop_footer_branch
    %11 = sbr.rel target = $region3
  $region8: #{tpu_custom_call.1} parent=0 // loop_exit
    _

</llo_original>
